<compile_context>
chip_gen: v7x
topology: tpu7x:2x2x1
jax: 0.10.0
libtpu: 0.0.40
codegen_flags: <defaults>
</compile_context>

<pallas_src>
import functools

import jax
import jax.numpy as jnp
from jax.experimental import pallas as pl
from jax.experimental.pallas import tpu as pltpu


def _round_up(x, m):
    return ((x + m - 1) // m) * m


# ---------------------------------------------------------------------------
# Fast path: clamp(W).T fully VMEM-resident, single pass over x, no k axis.
# ---------------------------------------------------------------------------
def _mono_resident_kernel(x_ref, w_ref, b_ref, o_ref, *, inv_scale):
    y = jnp.dot(x_ref[...], w_ref[...], preferred_element_type=jnp.float32)
    # ReLU((y + b) * s) == ReLU(y + b) * s  since s > 0.
    o_ref[...] = (jnp.maximum(y + b_ref[...], 0.0) * inv_scale).astype(o_ref.dtype)


# ---------------------------------------------------------------------------
# Streaming path: (batch, out, k) grid, accumulate directly into the f32
# output block (resident across k: its index_map ignores the k axis).
# ---------------------------------------------------------------------------
def _mono_streamed_kernel(x_ref, w_ref, b_ref, o_ref, *, inv_scale):
    k = pl.program_id(2)

    @pl.when(k == 0)
    def _init():
        o_ref[...] = jnp.zeros_like(o_ref)

    o_ref[...] += jnp.dot(x_ref[...], w_ref[...],
                          preferred_element_type=jnp.float32)

    @pl.when(k == pl.num_programs(2) - 1)
    def _epilogue():
        o_ref[...] = jnp.maximum(o_ref[...] + b_ref[...], 0.0) * inv_scale


def mono_linear_act(x, w, b, *, tm=512, tn=1024, tk=1024,
                    compute_dtype=jnp.float32,
                    resident_budget_bytes=20 << 20):
    """x: (B, in), w: (out, in), b: (out,) -> (B, out) float32.

    compute_dtype=jnp.bfloat16 pre-casts x / clamp(W).T in the wrapper for
    half the HBM traffic (results then deviate from the f32 reference).
    """
    B, K = x.shape
    N = w.shape[0]
    inv_scale = 1.0 / (2.0 * K)          # scale uses the *logical* in_features
    in_bytes = jnp.dtype(compute_dtype).itemsize

    # One-time W prep in HBM: clamp fuses with the transpose in XLA, and the
    # MXU then sees a clean NN contraction.  clamp(W).T == clamp(W.T).
    w_t = jnp.maximum(w, 0.0).T.astype(compute_dtype)     # (K, N)
    x_c = x.astype(compute_dtype)

    # Shrink tiles toward the (8,128)-rounded problem size (tiny layers stay tiny).
    tm = min(tm, _round_up(B, 8))
    tn = min(tn, _round_up(N, 128))
    tk = min(tk, _round_up(K, 128))

    Bp, Kp, Np = _round_up(B, tm), _round_up(K, tk), _round_up(N, tn)

    # Zero padding: padded K cols contribute 0 to the dot; padded N cols get
    # zero weight + zero bias -> ReLU(0)*s = 0, sliced off below.
    xp = jnp.pad(x_c, ((0, Bp - B), (0, Kp - K))) if (Bp, Kp) != (B, K) else x_c
    wp = jnp.pad(w_t, ((0, Kp - K), (0, Np - N))) if (Kp, Np) != (K, N) else w_t
    bp = (jnp.pad(b, (0, Np - N)) if Np != N else b).astype(jnp.float32).reshape(1, Np)

    # --- Fast path: W fully resident + one x / out panel fits the VMEM budget.
    fast_working = (2 * Kp * Np * in_bytes        # W (double-buffer upper bound)
                    + 2 * tm * Kp * in_bytes      # x panel
                    + 2 * tm * Np * 4             # out panel
                    + Np * 4)                     # bias

    if fast_working <= resident_budget_bytes:
        vmem_limit = min(64 << 20, max(32 << 20, int(fast_working) + (4 << 20)))
        cost = pl.CostEstimate(
            flops=2 * Bp * Kp * Np, transcendentals=0,
            bytes_accessed=(Bp * Kp * in_bytes + Kp * Np * in_bytes
                            + Bp * Np * 4 + Np * 4))
        out_p = pl.pallas_call(
            functools.partial(_mono_resident_kernel, inv_scale=inv_scale),
            out_shape=jax.ShapeDtypeStruct((Bp, Np), jnp.float32),
            grid_spec=pltpu.PrefetchScalarGridSpec(
                num_scalar_prefetch=0,
                grid=(Bp // tm,),
                in_specs=[
                    pl.BlockSpec((tm, Kp), lambda i: (i, 0)),   # x panel
                    pl.BlockSpec((Kp, Np), lambda i: (0, 0)),   # W^T resident
                    pl.BlockSpec((1, Np), lambda i: (0, 0)),    # bias
                ],
                out_specs=pl.BlockSpec((tm, Np), lambda i: (i, 0)),
            ),
            compiler_params=pltpu.CompilerParams(
                dimension_semantics=("parallel",),
                vmem_limit_bytes=vmem_limit),
            cost_estimate=cost,
        )(xp, wp, bp)

    # --- Streaming path: (batch, out, k) grid, acc into resident f32 out block.
    else:
        stream_working = (2 * tm * tk * in_bytes + 2 * tk * tn * in_bytes
                          + 2 * tm * tn * 4 + 2 * tn * 4)
        # Raise v5e's 16 MiB scoped default; stay <= v7x's 64 MiB physical VMEM.
        vmem_limit = min(64 << 20, max(32 << 20, int(stream_working) + (8 << 20)))
        cost = pl.CostEstimate(
            flops=2 * Bp * Kp * Np, transcendentals=0,
            bytes_accessed=((Bp // tm) * Kp * Np * in_bytes    # W re-streamed per batch panel
                            + (Np // tn) * Bp * Kp * in_bytes  # x re-streamed per out panel
                            + Bp * Np * 4 + Np * 4))
        out_p = pl.pallas_call(
            functools.partial(_mono_streamed_kernel, inv_scale=inv_scale),
            out_shape=jax.ShapeDtypeStruct((Bp, Np), jnp.float32),
            grid_spec=pltpu.PrefetchScalarGridSpec(
                num_scalar_prefetch=0,
                grid=(Bp // tm, Np // tn, Kp // tk),
                in_specs=[
                    pl.BlockSpec((tm, tk), lambda i, j, k: (i, k)),   # x tile
                    pl.BlockSpec((tk, tn), lambda i, j, k: (k, j)),   # W^T tile
                    pl.BlockSpec((1, tn), lambda i, j, k: (0, j)),    # bias tile
                ],
                out_specs=pl.BlockSpec((tm, tn), lambda i, j, k: (i, j)),
            ),
            compiler_params=pltpu.CompilerParams(
                dimension_semantics=("parallel", "parallel", "arbitrary"),
                vmem_limit_bytes=vmem_limit),
            cost_estimate=cost,
        )(xp, wp, bp)

    if (Bp, Np) != (B, N):
        out_p = out_p[:B, :N]
    return out_p


def mono_linear_act_ref(x, w, b):
    in_features = x.shape[-1]
    y = x @ jnp.maximum(w, 0.0).T + b
    y = y / (2.0 * in_features)
    return jnp.maximum(y, 0.0)


if __name__ == "__main__":
    key = jax.random.PRNGKey(0)
    kx, kw = jax.random.split(key)

    batch, in_features, out_features = 8, 32, 16

    x = jax.random.normal(kx, (batch, in_features), dtype=jnp.float32)
    # Deterministic params matching the module: randn(out, in) + 2, zeros(out).
    w = jax.random.normal(kw, (out_features, in_features), dtype=jnp.float32) + 2.0
    b = jnp.zeros((out_features,), dtype=jnp.float32)

    out = mono_linear_act(x, w, b)                     # f32 path -> W-resident fast path
    out = jax.block_until_ready(out)

    ref = mono_linear_act_ref(x, w, b)
    assert out.shape == (batch, out_features)
    assert jnp.allclose(out, ref, atol=1e-5, rtol=1e-5), "mismatch vs reference"

    print("KERNEL_OK")
</pallas_src>

<mosaic_0001>
module attributes {stable_mosaic.version = 11 : i64} {
  func.func @_mono_resident_kernel(%arg0: i32, %arg1: memref<8x128xf32, #tpu.memory_space<vmem>>, %arg2: memref<128x128xf32, #tpu.memory_space<vmem>>, %arg3: memref<1x128xf32, #tpu.memory_space<vmem>>, %arg4: memref<8x128xf32, #tpu.memory_space<vmem>>) attributes {dimension_semantics = [#tpu.dimension_semantics<parallel>], iteration_bounds = array<i64: 1>, scalar_prefetch = 0 : i64, scratch_operands = 0 : i64, tpu.core_type = #tpu.core_type<tc>, window_params = [{transform_indices = @transform_0, window_bounds = array<i64: 8, 128>}, {pipeline_mode = #tpu.pipeline_mode<synchronous>, transform_indices = @transform_1, window_bounds = array<i64: 128, 128>}, {pipeline_mode = #tpu.pipeline_mode<synchronous>, transform_indices = @transform_2, window_bounds = array<i64: 1, 128>}, {transform_indices = @transform_3, window_bounds = array<i64: 8, 128>}]} {
    %c0 = arith.constant 0 : index
    %c0_0 = arith.constant 0 : index
    %0 = vector.load %arg1[%c0, %c0_0] : memref<8x128xf32, #tpu.memory_space<vmem>>, vector<8x128xf32>
    %c0_1 = arith.constant 0 : index
    %c0_2 = arith.constant 0 : index
    %1 = vector.load %arg2[%c0_1, %c0_2] : memref<128x128xf32, #tpu.memory_space<vmem>>, vector<128x128xf32>
    %cst = arith.constant dense<0.000000e+00> : vector<8x128xf32>
    %2 = tpu.matmul %0, %1, %cst {dimension_numbers = #tpu.dot_dimension_numbers<[1], [0], [0], [1], [0, 0, 1, 1], [], []>} : vector<8x128xf32>, vector<128x128xf32>, vector<8x128xf32> -> vector<8x128xf32>
    %c0_3 = arith.constant 0 : index
    %c0_4 = arith.constant 0 : index
    %3 = vector.load %arg3[%c0_3, %c0_4] : memref<1x128xf32, #tpu.memory_space<vmem>>, vector<1x128xf32>
    %4 = vector.broadcast %3 : vector<1x128xf32> to vector<8x128xf32>
    %5 = arith.addf %2, %4 : vector<8x128xf32>
    %cst_5 = arith.constant 0.000000e+00 : f32
    %6 = vector.broadcast %cst_5 : f32 to vector<8x128xf32>
    %7 = arith.maximumf %5, %6 : vector<8x128xf32>
    %cst_6 = arith.constant 1.562500e-02 : f32
    %8 = vector.broadcast %cst_6 : f32 to vector<8x128xf32>
    %9 = arith.mulf %7, %8 : vector<8x128xf32>
    %c0_7 = arith.constant 0 : index
    %c0_8 = arith.constant 0 : index
    %10 = vector.load %arg4[%c0_7, %c0_8] : memref<8x128xf32, #tpu.memory_space<vmem>>, vector<8x128xf32>
    tpu.vector_store %arg4[%c0_7, %c0_8], %9 {strides = array<i32>} : memref<8x128xf32, #tpu.memory_space<vmem>>, vector<8x128xf32>,
    return
  }
  func.func @transform_0(%arg0: i32) -> (i32, i32) {
    %c0_i32 = arith.constant 0 : i32
    %c0_i32_0 = arith.constant 0 : i32
    return %arg0, %c0_i32 : i32, i32
  }
  func.func @transform_1(%arg0: i32) -> (i32, i32) {
    %c0_i32 = arith.constant 0 : i32
    %c0_i32_0 = arith.constant 0 : i32
    %c0_i32_1 = arith.constant 0 : i32
    return %c0_i32, %c0_i32_0 : i32, i32
  }
  func.func @transform_2(%arg0: i32) -> (i32, i32) {
    %c0_i32 = arith.constant 0 : i32
    %c0_i32_0 = arith.constant 0 : i32
    %c0_i32_1 = arith.constant 0 : i32
    return %c0_i32, %c0_i32_0 : i32, i32
  }
  func.func @transform_3(%arg0: i32) -> (i32, i32) {
    %c0_i32 = arith.constant 0 : i32
    %c0_i32_0 = arith.constant 0 : i32
    return %arg0, %c0_i32 : i32, i32
  }
}

</mosaic_0001>

<llo_original>
// kernel: tpu_custom_call.1
$region0: #{tpu_custom_call.1}
  #allocation0 [shape = 'u32[]', space=smem, size = 0x4, offset = 0x4, fixed_abs, tag = 'smem constant byte address 0x4 - core index']
  #allocation1 [shape = 'u32[144,128]{1,0:T(1,128)}', space=vmem, size = 0x12000, scoped, tag = 'internal scratch']
  %s0 = inlined_call_operand.hbm [shape: f32[8,128], index: 0, kind: input, shape index: {}]
  %s1 = inlined_call_operand.hbm [shape: f32[128,128], index: 1, kind: input, shape index: {}]
  %s2 = inlined_call_operand.vmem [shape: f32[1,128], index: 2, kind: input, shape index: {}]
  %s3 = inlined_call_operand.hbm [shape: f32[8,128], index: 3, kind: output, shape index: {}]
  %s4 = sld [smem:[#allocation0]]
  $region30: #{tpu_custom_call.1} parent=0
    _
  %s6 = ssub.s32 1, %s4
  %s7 = scalar_select 0, %s6, %s4
  $region1: #{tpu_custom_call.1} parent=0
    #allocation2 [shape = 'u8[4096]{0}', space=vmem, size = 0x1000, scoped, tag = 'input window, operand 0, single buffered']
    #allocation3 [shape = 's32[1]{0}', space=sflag, size = 0x4, scoped, tag = 'scoped memory for tpu_custom_call.1']
    #allocation4 [shape = 's32[1]{0}', space=sflag, size = 0x4, scoped, tag = 'scoped memory for tpu_custom_call.1']
    #allocation5 [shape = 'u8[65536]{0}', space=vmem, size = 0x10000, scoped, tag = 'input window, operand 1, single buffered']
    #allocation6 [shape = 's32[1]{0}', space=sflag, size = 0x4, scoped, tag = 'scoped memory for tpu_custom_call.1']
    #allocation7 [shape = 'u8[4096]{0}', space=vmem, size = 0x1000, scoped, tag = 'output window, operand 0, single buffered']
    %8 = vsyncpa [#allocation3], 0
    %9 = vsyncpa [#allocation6], 0
    %10 = vsyncpa [#allocation4], 0
    // Predicated region
    $region2: #{tpu_custom_call.1} parent=1 // pred_check
      _
    $region3: #{tpu_custom_call.1} parent=1 // pred_check_branch
      %12 = sbr.rel (0) target = $region5
    $region4: #{tpu_custom_call.1} parent=1 // pred_region
      %s14 = ssub.s32 128, 128
      %15 = vsyncadd [#allocation3], %s14
      %s17 = sshll.u32 [#allocation2], 4
      %s18 = int_to_ptr.vmem [resolvable:$true] %s17
      %20 = dma.hbm_to_vmem [thread:$0]  %s0, 128, %s18, [#allocation3]
    $region5: #{tpu_custom_call.1} parent=1 // pred_fallthru
      _
    // Predicated region
    $region6: #{tpu_custom_call.1} parent=1 // pred_check
      _
    $region7: #{tpu_custom_call.1} parent=1 // pred_check_branch
      %22 = sbr.rel (0) target = $region9
    $region8: #{tpu_custom_call.1} parent=1 // pred_region
      %s24 = ssub.s32 2048, 2048
      %25 = vsyncadd [#allocation6], %s24
      %s26 = sshll.u32 [#allocation5], 4
      %s27 = int_to_ptr.vmem [resolvable:$true] %s26
      %32 = dma.hbm_to_vmem [thread:$0]  %s1, 2048, %s27, [#allocation6], 128, 128, 8
    $region9: #{tpu_custom_call.1} parent=1 // pred_fallthru
      _
    // Predicated region
    $region10: #{tpu_custom_call.1} parent=1 // pred_check
      _
    $region11: #{tpu_custom_call.1} parent=1 // pred_check_branch
      %34 = sbr.rel (0) target = $region13
    $region12: #{tpu_custom_call.1} parent=1 // pred_region
      _
    $region13: #{tpu_custom_call.1} parent=1 // pred_fallthru
      _
    // Predicated region
    $region14: #{tpu_custom_call.1} parent=1 // pred_check
      _
    $region15: #{tpu_custom_call.1} parent=1 // pred_check_branch
      %36 = sbr.rel (0) target = $region17
    $region16: #{tpu_custom_call.1} parent=1 // pred_region
      %37 = dma.done [#allocation3], 128
    $region17: #{tpu_custom_call.1} parent=1 // pred_fallthru
      _
    // Predicated region
    $region18: #{tpu_custom_call.1} parent=1 // pred_check
      _
    $region19: #{tpu_custom_call.1} parent=1 // pred_check_branch
      %39 = sbr.rel (0) target = $region21
    $region20: #{tpu_custom_call.1} parent=1 // pred_region
      %40 = dma.done [#allocation6], 2048
    $region21: #{tpu_custom_call.1} parent=1 // pred_fallthru
      _
    %v41 = vld [vmem:[#allocation2] sm:$0xff]
    %v42 = vld [vmem:[#allocation5] sm:$0xff]
    %v43 = vld [vmem:[#allocation5 + $0x8] sm:$0xff]
    %v44 = vld [vmem:[#allocation5 + $0x10] sm:$0xff]
    %v45 = vld [vmem:[#allocation5 + $0x18] sm:$0xff]
    %v46 = vld [vmem:[#allocation5 + $0x20] sm:$0xff]
    %v47 = vld [vmem:[#allocation5 + $0x28] sm:$0xff]
    %v48 = vld [vmem:[#allocation5 + $0x30] sm:$0xff]
    %v49 = vld [vmem:[#allocation5 + $0x38] sm:$0xff]
    %v50 = vld [vmem:[#allocation5 + $0x40] sm:$0xff]
    %v51 = vld [vmem:[#allocation5 + $0x48] sm:$0xff]
    %v52 = vld [vmem:[#allocation5 + $0x50] sm:$0xff]
    %v53 = vld [vmem:[#allocation5 + $0x58] sm:$0xff]
    %v54 = vld [vmem:[#allocation5 + $0x60] sm:$0xff]
    %v55 = vld [vmem:[#allocation5 + $0x68] sm:$0xff]
    %v56 = vld [vmem:[#allocation5 + $0x70] sm:$0xff]
    %v57 = vld [vmem:[#allocation5 + $0x78] sm:$0xff]
    %v58 = vld [vmem:[%s2] sm:$0x1]
    %v60 = vlaneseq
    %v61 = vshrl.u32 %v60, 7
    %v62 = vsub.s32 0, %v61
    %v63 = vrot.slane %v58, %v62
    %65 = vmatprep.subr.mxu0 0.0
    %66 = vmatpush1.msra.mxu0 %v42
    %67 = vmatprep.subr.mxu0 0.0
    %68 = vmatpush1.msra.mxu0 %v43
    %69 = vmatprep.subr.mxu0 0.0
    %70 = vmatpush1.msra.mxu0 %v44
    %71 = vmatprep.subr.mxu0 0.0
    %72 = vmatpush1.msra.mxu0 %v45
    %73 = vmatprep.subr.mxu0 0.0
    %74 = vmatpush1.msra.mxu0 %v46
    %75 = vmatprep.subr.mxu0 0.0
    %76 = vmatpush1.msra.mxu0 %v47
    %77 = vmatprep.subr.mxu0 0.0
    %78 = vmatpush1.msra.mxu0 %v48
    %79 = vmatprep.subr.mxu0 0.0
    %80 = vmatpush1.msra.mxu0 %v49
    %81 = vmatprep.subr.mxu0 0.0
    %82 = vmatpush1.msra.mxu0 %v50
    %83 = vmatprep.subr.mxu0 0.0
    %84 = vmatpush1.msra.mxu0 %v51
    %85 = vmatprep.subr.mxu0 0.0
    %86 = vmatpush1.msra.mxu0 %v52
    %87 = vmatprep.subr.mxu0 0.0
    %88 = vmatpush1.msra.mxu0 %v53
    %89 = vmatprep.subr.mxu0 0.0
    %90 = vmatpush1.msra.mxu0 %v54
    %91 = vmatprep.subr.mxu0 0.0
    %92 = vmatpush1.msra.mxu0 %v55
    %93 = vmatprep.subr.mxu0 0.0
    %94 = vmatpush1.msra.mxu0 %v56
    %95 = vmatprep.subr.mxu0 0.0
    %96 = vmatpush1.msra.mxu0 %v57
    %97 = vmatprep.subr.mxu0 0.0
    %98 = vmatpush1.msra.mxu0 0.0
    %99 = vmatprep.subr.mxu0 0.0
    %100 = vmatpush1.msra.mxu0 0.0
    %101 = vmatprep.subr.mxu0 0.0
    %102 = vmatpush1.msra.mxu0 0.0
    %103 = vmatprep.subr.mxu0 0.0
    %104 = vmatpush1.msra.mxu0 0.0
    %105 = vmatprep.subr.mxu0 0.0
    %106 = vmatpush1.msra.mxu0 0.0
    %107 = vmatprep.subr.mxu0 0.0
    %108 = vmatpush1.msra.mxu0 0.0
    %109 = vmatprep.subr.mxu0 0.0
    %110 = vmatpush1.msra.mxu0 0.0
    %111 = vmatprep.subr.mxu0 0.0
    %112 = vmatpush1.msra.mxu0 0.0
    %113 = vmatprep.subr.mxu0 0.0
    %114 = vmatpush1.msra.mxu0 0.0
    %115 = vmatprep.subr.mxu0 0.0
    %116 = vmatpush1.msra.mxu0 0.0
    %117 = vmatprep.subr.mxu0 0.0
    %118 = vmatpush1.msra.mxu0 0.0
    %119 = vmatprep.subr.mxu0 0.0
    %120 = vmatpush1.msra.mxu0 0.0
    %121 = vmatprep.subr.mxu0 0.0
    %122 = vmatpush1.msra.mxu0 0.0
    %123 = vmatprep.subr.mxu0 0.0
    %124 = vmatpush1.msra.mxu0 0.0
    %125 = vmatprep.subr.mxu0 0.0
    %126 = vmatpush1.msra.mxu0 0.0
    %127 = vmatprep.subr.mxu0 0.0
    %128 = vmatpush1.msra.mxu0 0.0
    %129 = vmatprep.mubr.f32.mxu0 0.0
    %130 = vmatmul.mubr.f32.gmra.mrb[0].mxu0 %v41
    %v131 = vpop.f32.mrb[0].mxu0
    %v132 = vadd.f32 %v63, %v131
    %v133 = vpop.f32.mrb[0].mxu0
    %134 = vdwg.mxu0
    %v135 = vmax.f32 %v132, 0.0
    %v136 = vmul.f32 %v135, 0.015625
    %137 = vst [vmem:[#allocation7] sm:$0xff] %v136
    // Predicated region
    $region22: #{tpu_custom_call.1} parent=1 // pred_check
      _
    $region23: #{tpu_custom_call.1} parent=1 // pred_check_branch
      %139 = sbr.rel (0) target = $region25
    $region24: #{tpu_custom_call.1} parent=1 // pred_region
      %s141 = ssub.s32 128, 128
      %142 = vsyncadd [#allocation4], %s141
      %s144 = sshll.u32 [#allocation7], 4
      %s145 = int_to_ptr.vmem [resolvable:$true] %s144
      %147 = dma.vmem_to_hbm [thread:$0]  %s145, 128, %s3, [#allocation4]
    $region25: #{tpu_custom_call.1} parent=1 // pred_fallthru
      _
    // Predicated region
    $region26: #{tpu_custom_call.1} parent=1 // pred_check
      _
    $region27: #{tpu_custom_call.1} parent=1 // pred_check_branch
      %149 = sbr.rel (0) target = $region29
    $region28: #{tpu_custom_call.1} parent=1 // pred_region
      %150 = dma.done [#allocation4], 128
    $region29: #{tpu_custom_call.1} parent=1 // pred_fallthru
      _
    %151 = vsyncpa [#allocation3], 1
    %152 = vsyncpa [#allocation6], 1
    %153 = vsyncpa [#allocation4], 1

</llo_original>
